<compile_context>
chip_gen: v7x
topology: tpu7x:2x2x1
jax: 0.10.0
libtpu: 0.0.40
codegen_flags: <defaults>
</compile_context>

<pallas_src>
import math
import functools
import numpy as np

import jax
import jax.numpy as jnp
from jax.experimental import pallas as pl
from jax.experimental.pallas import tpu as pltpu


def _round_up(v, m):
    return ((v + m - 1) // m) * m


def _single_tensorcore_chip():
    """True on single-TC TPUs (v5e / v6e): fold the batch into one grid step there.

    On multi-TC chips (v7x, or megacore v4/v5p) the batch goes on a "parallel" grid axis so
    both TensorCores get work.  A wrong guess only costs ~0.35 us of per-step overhead.
    """
    try:
        kind = jax.devices()[0].device_kind.lower()
    except Exception:
        return False
    return any(t in kind for t in ("v5 lite", "v5e", "v6 lite", "v6e"))


def _make_kernel(bblk, Cin, Cpad, shifts, P_out, Kc, neg_slope=0.2, eps=1e-8):
    """Kernel closure over the static hyper-parameters.

    Refs:
      x_ref: (bblk, Cpad, P_in)   zero-padded (channels->Cpad, spatial halo), spatially
                                  flattened input, channels-first.
      w_ref: (Cout_p, Kc)         tap-major conv weights with the WScale scale folded in and a
                                  trailing Cpad-wide block whose first column is the bias.
      o_ref: (bblk, Cout_p, P_out) lane-dense output on the padded flat grid.
    """
    n_bias_rows = Kc - len(shifts) * Cpad      # == Cpad
    inv_cin = 1.0 / Cin

    def kernel(x_ref, w_ref, o_ref):
        w = w_ref[...].astype(jnp.float32)                              # (Cout_p, Kc)

        # Constant sublane block for the bias fold: row 0 ones, rest zero.  Built once
        # (hoisted out of the per-batch loop) from an iota -> no unaligned concatenation.
        bias_rows = (jax.lax.broadcasted_iota(jnp.int32, (n_bias_rows, P_out), 0) == 0
                     ).astype(jnp.float32)

        # One fused im2col matmul per batch element in this block (bblk == 1 when the batch is
        # on the grid).  Each conv tap (dy, dx) is a constant lane shift dy*Wp + dx on the
        # padded flat grid, so the operand is a sublane-aligned stack of shifted slices.
        # TODO(synk): for large batch blocks on single-TC chips, pack the batch along lanes and
        # issue a single (Cout_p, Kc) x (Kc, bblk*P_out) dot instead of this loop.
        for n in range(bblk):
            x_n = x_ref[n].astype(jnp.float32)                          # (Cpad, P_in)

            # ---- PixelNormLayer: x / sqrt(mean(x^2, channel) + eps).  Mean is over the Cin
            # *real* channels (padded rows are zero, so the sum is exact); padded positions
            # stay exactly zero (0 * rsqrt(eps) == 0).
            ms = jnp.sum(x_n * x_n, axis=0, keepdims=True) * inv_cin
            xn = x_n * jax.lax.rsqrt(ms + eps)                          # (Cpad, P_in)

            pat = jnp.concatenate(
                [xn[:, s:s + P_out] for s in shifts] + [bias_rows], axis=0)  # (Kc, P_out)

            y = jnp.dot(w, pat, preferred_element_type=jnp.float32)     # conv + WScale(+bias)
            y = jnp.where(y >= 0.0, y, neg_slope * y)                   # LeakyReLU(0.2)
            o_ref[n] = y.astype(o_ref.dtype)

    return kernel


@functools.partial(jax.jit, static_argnums=(3, 4, 5))
def _norm_conv_block(x_nchw, w_oihw, b, kernel_size, padding, batch_block):
    N, Cin, H, W = x_nchw.shape
    Cout = w_oihw.shape[0]
    K, pad = kernel_size, padding

    Hp, Wp = H + 2 * pad, W + 2 * pad
    Hout, Wout = Hp - K + 1, Wp - K + 1

    # Sublane / lane padded geometry.
    Cpad = _round_up(Cin, 8)                  # 8-sublane aligned tap channel blocks
    Cout_p = _round_up(Cout, 8)
    shifts = tuple(dy * Wp + dx for dy in range(K) for dx in range(K))
    P_out = _round_up(Hout * Wp, 128)         # lane-dense output (multiple of 128)
    need = P_out + max(shifts)                # flat lanes the taps may read
    extra_rows = max(0, -(-(need - Hp * Wp) // Wp))
    P_in = (Hp + extra_rows) * Wp             # input block spans the full lane extent

    # WScaleLayer: gain = sqrt(2)/kernel_size, scale = gain / sqrt(fan_in = in_channels).
    scale = math.sqrt(2.0) / K / math.sqrt(Cin)

    # Single fused pad (channel pad + spatial halo + extra bottom zero rows), one reshape.
    # Zero padding commutes with PixelNorm (zeros stay zeros), so padding before it is exact.
    xp = jnp.pad(x_nchw, ((0, 0), (0, Cpad - Cin), (pad, pad + extra_rows), (pad, pad)))
    x_flat = xp.reshape(N, Cpad, P_in)

    # Tap-major weight matrix (Cout_p, K*K*Cpad) matching the im2col row order, scale folded
    # in, plus a trailing Cpad-wide block whose first column carries the WScale bias.
    Kc = K * K * Cpad + Cpad
    w_t = jnp.transpose(w_oihw, (0, 2, 3, 1))                       # (Cout, K, K, Cin)
    w_t = jnp.pad(w_t, ((0, Cout_p - Cout), (0, 0), (0, 0), (0, Cpad - Cin)))
    w2 = w_t.reshape(Cout_p, K * K * Cpad) * scale
    bias_col = jnp.pad(b.reshape(Cout, 1).astype(w2.dtype),
                       ((0, Cout_p - Cout), (0, Cpad - 1)))          # (Cout_p, Cpad)
    w2 = jnp.concatenate([w2, bias_col], axis=1)                     # (Cout_p, Kc)

    kernel = _make_kernel(batch_block, Cin, Cpad, shifts, P_out, Kc)

    out_flat = pl.pallas_call(
        kernel,
        out_shape=jax.ShapeDtypeStruct((N, Cout_p, P_out), x_nchw.dtype),
        grid=(N // batch_block,),
        in_specs=[
            pl.BlockSpec((batch_block, Cpad, P_in), lambda i: (i, 0, 0)),
            pl.BlockSpec((Cout_p, Kc), lambda i: (0, 0)),
        ],
        out_specs=pl.BlockSpec((batch_block, Cout_p, P_out), lambda i: (i, 0, 0)),
        compiler_params=pltpu.CompilerParams(dimension_semantics=("parallel",)),
    )(x_flat, w2)

    # Drop the padded-grid margins: flat p -> (oy, ox) with row stride Wp.
    # TODO(synk): if the consumer can take the Wp-stride padded-grid layout, defer this slice.
    out = out_flat[:, :Cout, :Hout * Wp].reshape(N, Cout, Hout, Wp)[:, :, :, :Wout]
    return out


def norm_conv_block(x_nchw, w_oihw, b, kernel_size, padding):
    """Forward pass of NormConvBlock (PyTorch NCHW / OIHW conventions)."""
    batch_block = x_nchw.shape[0] if _single_tensorcore_chip() else 1
    return _norm_conv_block(x_nchw, w_oihw, b, kernel_size, padding, batch_block)


def reference_norm_conv_block(x, w, b, kernel_size, padding):
    """Pure-JAX reference mirroring the PyTorch forward."""
    Cin = x.shape[1]
    scale = math.sqrt(2.0) / kernel_size / math.sqrt(Cin)
    xn = x / jnp.sqrt(jnp.mean(x ** 2, axis=1, keepdims=True) + 1e-8)
    y = jax.lax.conv_general_dilated(
        xn, w, window_strides=(1, 1),
        padding=[(padding, padding), (padding, padding)],
        dimension_numbers=("NCHW", "OIHW", "NCHW"),
    )
    y = y * scale + b.reshape(1, -1, 1, 1)
    return jnp.where(y >= 0, y, 0.2 * y)


if __name__ == "__main__":
    # NormConvBlock(in_channels=4, out_channels=8, kernel_size=3, padding=1)
    N, Cin, H, W = 2, 4, 16, 16
    Cout, K, PAD = 8, 3, 1

    key = jax.random.PRNGKey(0)
    kx, kw, kb = jax.random.split(key, 3)
    x = jax.random.normal(kx, (N, Cin, H, W), dtype=jnp.float32)
    # deterministic synthetic parameters (shapes from the module __init__)
    w = jax.random.normal(kw, (Cout, Cin, K, K), dtype=jnp.float32) * 0.1
    b = jax.random.normal(kb, (Cout,), dtype=jnp.float32)

    out = jax.block_until_ready(norm_conv_block(x, w, b, K, PAD))

    ref = reference_norm_conv_block(x, w, b, K, PAD)
    assert out.shape == (N, Cout, H, W)
    assert np.allclose(np.asarray(out), np.asarray(ref), atol=1e-4, rtol=1e-4)

    print("KERNEL_OK")
</pallas_src>

<mosaic_0001>
module attributes {stable_mosaic.version = 11 : i64} {
  func.func @kernel(%arg0: i32, %arg1: memref<1x8x432xf32, #tpu.memory_space<vmem>>, %arg2: memref<8x80xf32, #tpu.memory_space<vmem>>, %arg3: memref<1x8x384xf32, #tpu.memory_space<vmem>>) attributes {dimension_semantics = [#tpu.dimension_semantics<parallel>], iteration_bounds = array<i64: 2>, scalar_prefetch = 0 : i64, scratch_operands = 0 : i64, tpu.core_type = #tpu.core_type<tc>, window_params = [{transform_indices = @transform_0, window_bounds = array<i64: 1, 8, 432>}, {pipeline_mode = #tpu.pipeline_mode<synchronous>, transform_indices = @transform_1, window_bounds = array<i64: 8, 80>}, {transform_indices = @transform_2, window_bounds = array<i64: 1, 8, 384>}]} {
    %c0 = arith.constant 0 : index
    %c0_0 = arith.constant 0 : index
    %0 = vector.load %arg2[%c0, %c0_0] : memref<8x80xf32, #tpu.memory_space<vmem>>, vector<8x80xf32>
    %1 = tpu.iota {dimensions = array<i32: 0>} : vector<8x384xi32>
    %c0_i32 = arith.constant 0 : i32
    %2 = vector.broadcast %c0_i32 : i32 to vector<8x384xi32>
    %3 = arith.cmpi eq, %1, %2 : vector<8x384xi32>
    %4 = arith.extui %3 : vector<8x384xi1> to vector<8x384xi32>
    %5 = arith.sitofp %4 : vector<8x384xi32> to vector<8x384xf32>
    %c0_1 = arith.constant 0 : index
    %c0_2 = arith.constant 0 : index
    %c0_3 = arith.constant 0 : index
    %6 = vector.load %arg1[%c0_1, %c0_2, %c0_3] : memref<1x8x432xf32, #tpu.memory_space<vmem>>, vector<1x8x432xf32>
    %7 = vector.shape_cast %6 : vector<1x8x432xf32> to vector<8x432xf32>
    %8 = arith.mulf %7, %7 : vector<8x432xf32>
    %cst = arith.constant dense<0.000000e+00> : vector<432xf32>
    %9 = vector.multi_reduction <add>, %8, %cst [0] : vector<8x432xf32> to vector<432xf32>
    %10 = vector.shape_cast %9 : vector<432xf32> to vector<1x432xf32>
    %cst_4 = arith.constant 2.500000e-01 : f32
    %11 = vector.broadcast %cst_4 : f32 to vector<1x432xf32>
    %12 = arith.mulf %10, %11 : vector<1x432xf32>
    %cst_5 = arith.constant 9.99999993E-9 : f32
    %13 = vector.broadcast %cst_5 : f32 to vector<1x432xf32>
    %14 = arith.addf %12, %13 : vector<1x432xf32>
    %15 = math.rsqrt %14 : vector<1x432xf32>
    %16 = vector.broadcast %15 : vector<1x432xf32> to vector<8x432xf32>
    %17 = arith.mulf %7, %16 : vector<8x432xf32>
    %18 = vector.extract_strided_slice %17 {offsets = [0, 0], sizes = [8, 384], strides = [1, 1]} : vector<8x432xf32> to vector<8x384xf32>
    %19 = vector.extract_strided_slice %17 {offsets = [0, 1], sizes = [8, 384], strides = [1, 1]} : vector<8x432xf32> to vector<8x384xf32>
    %20 = vector.extract_strided_slice %17 {offsets = [0, 2], sizes = [8, 384], strides = [1, 1]} : vector<8x432xf32> to vector<8x384xf32>
    %21 = vector.extract_strided_slice %17 {offsets = [0, 18], sizes = [8, 384], strides = [1, 1]} : vector<8x432xf32> to vector<8x384xf32>
    %22 = vector.extract_strided_slice %17 {offsets = [0, 19], sizes = [8, 384], strides = [1, 1]} : vector<8x432xf32> to vector<8x384xf32>
    %23 = vector.extract_strided_slice %17 {offsets = [0, 20], sizes = [8, 384], strides = [1, 1]} : vector<8x432xf32> to vector<8x384xf32>
    %24 = vector.extract_strided_slice %17 {offsets = [0, 36], sizes = [8, 384], strides = [1, 1]} : vector<8x432xf32> to vector<8x384xf32>
    %25 = vector.extract_strided_slice %17 {offsets = [0, 37], sizes = [8, 384], strides = [1, 1]} : vector<8x432xf32> to vector<8x384xf32>
    %26 = vector.extract_strided_slice %17 {offsets = [0, 38], sizes = [8, 384], strides = [1, 1]} : vector<8x432xf32> to vector<8x384xf32>
    %27 = tpu.concatenate %18, %19, %20, %21, %22, %23, %24, %25, %26, %5 in 0 : vector<8x384xf32>, vector<8x384xf32>, vector<8x384xf32>, vector<8x384xf32>, vector<8x384xf32>, vector<8x384xf32>, vector<8x384xf32>, vector<8x384xf32>, vector<8x384xf32>, vector<8x384xf32> -> vector<80x384xf32>
    %cst_6 = arith.constant dense<0.000000e+00> : vector<8x384xf32>
    %28 = tpu.matmul %0, %27, %cst_6 {dimension_numbers = #tpu.dot_dimension_numbers<[1], [0], [0], [1], [0, 0, 1, 1], [], []>} : vector<8x80xf32>, vector<80x384xf32>, vector<8x384xf32> -> vector<8x384xf32>
    %cst_7 = arith.constant 0.000000e+00 : f32
    %29 = vector.broadcast %cst_7 : f32 to vector<8x384xf32>
    %30 = arith.cmpf oge, %28, %29 : vector<8x384xf32>
    %cst_8 = arith.constant 2.000000e-01 : f32
    %31 = vector.broadcast %cst_8 : f32 to vector<8x384xf32>
    %32 = arith.mulf %31, %28 : vector<8x384xf32>
    %33 = arith.select %30, %28, %32 : vector<8x384xi1>, vector<8x384xf32>
    %c0_9 = arith.constant 0 : index
    %c0_10 = arith.constant 0 : index
    %c0_11 = arith.constant 0 : index
    %34 = vector.load %arg3[%c0_9, %c0_10, %c0_11] : memref<1x8x384xf32, #tpu.memory_space<vmem>>, vector<1x8x384xf32>
    %35 = vector.shape_cast %34 : vector<1x8x384xf32> to vector<8x384xf32>
    %36 = vector.shape_cast %33 : vector<8x384xf32> to vector<1x8x384xf32>
    tpu.vector_store %arg3[%c0_9, %c0_10, %c0_11], %36 {strides = array<i32>} : memref<1x8x384xf32, #tpu.memory_space<vmem>>, vector<1x8x384xf32>,
    return
  }
  func.func @transform_0(%arg0: i32) -> (i32, i32, i32) {
    %c0_i32 = arith.constant 0 : i32
    %c0_i32_0 = arith.constant 0 : i32
    %c0_i32_1 = arith.constant 0 : i32
    return %arg0, %c0_i32, %c0_i32_0 : i32, i32, i32
  }
  func.func @transform_1(%arg0: i32) -> (i32, i32) {
    %c0_i32 = arith.constant 0 : i32
    %c0_i32_0 = arith.constant 0 : i32
    %c0_i32_1 = arith.constant 0 : i32
    return %c0_i32, %c0_i32_0 : i32, i32
  }
  func.func @transform_2(%arg0: i32) -> (i32, i32, i32) {
    %c0_i32 = arith.constant 0 : i32
    %c0_i32_0 = arith.constant 0 : i32
    %c0_i32_1 = arith.constant 0 : i32
    return %arg0, %c0_i32, %c0_i32_0 : i32, i32, i32
  }
}

</mosaic_0001>

<llo_original>
// kernel: _norm_conv_block.1
$region0: #{_norm_conv_block.1}
  #allocation0 [shape = 'u32[]', space=smem, size = 0x4, offset = 0x4, fixed_abs, tag = 'smem constant byte address 0x4 - core index']
  #allocation1 [shape = 'u32[144,128]{1,0:T(1,128)}', space=vmem, size = 0x12000, scoped, tag = 'internal scratch']
  %s0 = inlined_call_operand.vmem [shape: f32[2,8,432], index: 0, kind: input, shape index: {}]
  %s1 = inlined_call_operand.vmem [shape: f32[8,80], index: 1, kind: input, shape index: {}]
  %s2 = inlined_call_operand.vmem [shape: f32[2,8,384], index: 2, kind: output, shape index: {}]
  %s3 = sld [smem:[#allocation0]]
  $region41: #{_norm_conv_block.1} parent=0
    _
  %s5 = ssub.s32 1, %s3
  %s6 = scalar_select 0, %s5, %s3
  loop: start=0, step=1, limit=4
  $region2: #{_norm_conv_block.1} parent=0 // loop_pre_header
    _
  $region3: #{_norm_conv_block.1} parent=0 // loop_header
    %s8 = sphi 0, %s12
    %p9 = scmp.ge.s32.totalorder %s8, 4
    %s18 = sphi 0, %s20
    %s21 = sphi 0, %s18
    %s22 = sphi 0, %s21
    %s38 = sphi 0, %s22
    %s42 = sphi 0, %s42
    %s44 = sphi 0, %s42
    %s45 = sphi 0, %s44
    %s59 = sphi 0, %s45
    %s65 = sphi 0, %s67
    %s68 = sphi 0, %s65
    %s69 = sphi 0, %s68
    %s85 = sphi 0, %s69
  $region4: #{_norm_conv_block.1} parent=0 // loop_header_branch
    %11 = sbr.rel (%p9) target = $region8
  $region5: #{_norm_conv_block.1} parent=0 // loop_body
    %s13 = ssub.s32 %s8, 1
    %s14 = ssub.s32 %s8, 2
    %s15 = sadd.s32 %s8, 1
    %s16 = ssub.s32 %s8, %s15
    %p17 = scmp.eq.s32.totalorder %s16, 0
    %s19 = sadd.s32 %s18, 1
    %s20 = scalar_select %p17, %s18, %s19
    %p23 = pneg %p17
    %p24 = scmp.eq.s32.totalorder %s8, 1
    %p25 = por %p23, %p24
    %p26 = scmp.ne.s32.totalorder %s18, %s21
    %p27 = scmp.eq.s32.totalorder %s8, 0
    %p28 = por %p26, %p27
    %p29 = scmp.ne.s32.totalorder %s18, %s21
    %p30 = scmp.eq.s32.totalorder %s13, 1
    %p31 = por %p29, %p30
    %p32 = scmp.ne.s32.totalorder %s21, %s22
    %p33 = scmp.eq.s32.totalorder %s13, 0
    %p34 = por %p32, %p33
    %p35 = scmp.ne.s32.totalorder %s21, %s22
    %p36 = scmp.eq.s32.totalorder %s14, 1
    %p37 = por %p35, %p36
    %p39 = scmp.ne.s32.totalorder %s22, %s38
    %p40 = scmp.eq.s32.totalorder %s14, 0
    %p41 = por %p39, %p40
    %s43 = sadd.s32 %s42, 1
    %p46 = scmp.eq.s32.totalorder %s8, 1
    %p47 = scmp.ne.s32.totalorder %s42, %s44
    %p48 = scmp.eq.s32.totalorder %s8, 0
    %p49 = por %p47, %p48
    %p50 = scmp.ne.s32.totalorder %s42, %s44
    %p51 = scmp.eq.s32.totalorder %s13, 1
    %p52 = por %p50, %p51
    %p53 = scmp.ne.s32.totalorder %s44, %s45
    %p54 = scmp.eq.s32.totalorder %s13, 0
    %p55 = por %p53, %p54
    %p56 = scmp.ne.s32.totalorder %s44, %s45
    %p57 = scmp.eq.s32.totalorder %s14, 1
    %p58 = por %p56, %p57
    %p60 = scmp.ne.s32.totalorder %s45, %s59
    %p61 = scmp.eq.s32.totalorder %s14, 0
    %p62 = por %p60, %p61
    %s63 = ssub.s32 %s8, %s15
    %p64 = scmp.eq.s32.totalorder %s63, 0
    %s66 = sadd.s32 %s65, 1
    %s67 = scalar_select %p64, %s65, %s66
    %p70 = pneg %p64
    %p71 = scmp.eq.s32.totalorder %s8, 1
    %p72 = por %p70, %p71
    %p73 = scmp.ne.s32.totalorder %s65, %s68
    %p74 = scmp.eq.s32.totalorder %s8, 0
    %p75 = por %p73, %p74
    %p76 = scmp.ne.s32.totalorder %s65, %s68
    %p77 = scmp.eq.s32.totalorder %s13, 1
    %p78 = por %p76, %p77
    %p79 = scmp.ne.s32.totalorder %s68, %s69
    %p80 = scmp.eq.s32.totalorder %s13, 0
    %p81 = por %p79, %p80
    %p82 = scmp.ne.s32.totalorder %s68, %s69
    %p83 = scmp.eq.s32.totalorder %s14, 1
    %p84 = por %p82, %p83
    %p86 = scmp.ne.s32.totalorder %s69, %s85
    %p87 = scmp.eq.s32.totalorder %s14, 0
    %p88 = por %p86, %p87
    %p89 = scmp.le.s32.totalorder 1, %s8
    %p90 = scmp.lt.s32.totalorder %s8, 3
    %p91 = pnand %p89, %p90
    %p92 = pneg %p91
    // Predicated region
    $region9: #{_norm_conv_block.1} parent=5 // pred_check
      _
    $region10: #{_norm_conv_block.1} parent=5 // pred_check_branch
      %94 = sbr.rel (%p91) target = $region12
    $region11: #{_norm_conv_block.1} parent=5 // pred_region
      %s95 = ssub.s32 %s8, 1
      // Predicated region
      $region13: #{_norm_conv_block.1} parent=11 // pred_check
        %p96 = pneg %p55
      $region14: #{_norm_conv_block.1} parent=11 // pred_check_branch
        %98 = sbr.rel (%p96) target = $region16
      $region15: #{_norm_conv_block.1} parent=11 // pred_region
        _
      $region16: #{_norm_conv_block.1} parent=11 // pred_fallthru
        _
    $region12: #{_norm_conv_block.1} parent=5 // pred_fallthru
      _
    %p99 = scmp.lt.s32.totalorder %s8, 2
    // Predicated region
    $region17: #{_norm_conv_block.1} parent=5 // pred_check
      %p100 = pneg %p99
    $region18: #{_norm_conv_block.1} parent=5 // pred_check_branch
      %102 = sbr.rel (%p100) target = $region20
    $region19: #{_norm_conv_block.1} parent=5 // pred_region
      // Predicated region
      $region21: #{_norm_conv_block.1} parent=19 // pred_check
        %p103 = pneg %p28
      $region22: #{_norm_conv_block.1} parent=19 // pred_check_branch
        %105 = sbr.rel (%p103) target = $region24
      $region23: #{_norm_conv_block.1} parent=19 // pred_region
        %p106 = scmp.lt.s32.totalorder %s8, 1
        %s107 = scalar_select %p106, %s8, 1
        %s108 = smul.addr %s107, 4
        %s109 = smul.addr %s108, 8
        %s110 = scalar_lea.vmem %s0, %s109
      $region24: #{_norm_conv_block.1} parent=19 // pred_fallthru
        _
    $region20: #{_norm_conv_block.1} parent=5 // pred_fallthru
      _
    %p111 = scmp.le.s32.totalorder 1, %s8
    %p112 = scmp.lt.s32.totalorder %s8, 3
    %p113 = pnand %p111, %p112
    %p114 = pneg %p113
    // Predicated region
    $region25: #{_norm_conv_block.1} parent=5 // pred_check
      _
    $region26: #{_norm_conv_block.1} parent=5 // pred_check_branch
      %116 = sbr.rel (%p113) target = $region28
    $region27: #{_norm_conv_block.1} parent=5 // pred_region
      %s117 = ssub.s32 %s8, 1
      %p118 = scmp.lt.s32.totalorder %s13, 1
      %s119 = scalar_select %p118, %s13, 1
      %s120 = smul.addr %s119, 4
      %s121 = smul.addr %s120, 8
      %s122 = scalar_lea.vmem %s0, %s121
      %p123 = pneg %p34
      %p124 = pneg %p31
      %p125 = pneg %p55
      %p126 = pneg %p52
      %p127 = pneg %p81
      %p128 = pneg %p78
      %p129 = scmp.lt.s32.totalorder %s13, 1
      %s130 = scalar_select %p129, %s13, 1
      %s131 = smul.addr %s130, 3
      %s132 = smul.addr %s131, 8
      %s133 = scalar_lea.vmem %s2, %s132
      %p134 = scmp.lt.s32.totalorder %s13, 1
      %s135 = scalar_select %p134, %s13, 1
      %s136 = smul.addr %s135, 4
      %s137 = smul.addr %s136, 8
      %s138 = scalar_lea.vmem %s0, %s137
      %p139 = scmp.lt.s32.totalorder %s13, 1
      %s140 = scalar_select %p139, %s13, 1
      %s141 = smul.addr %s140, 3
      %s142 = smul.addr %s141, 8
      %s143 = scalar_lea.vmem %s2, %s142
      %v144 = vld [vmem:[%s1] sm:$0xff]
      %v145 = vlaneseq
      %v146 = vshrl.u32 %v145, 7
      %vm147 = vcmp.eq.s32.totalorder %v146, 0
      %v148 = vsel %vm147, 1, 0
      %v149 = vcvt.s32.f32 %v148
      %v150 = vld [vmem:[%s138] sm:$0xff]
      %v151 = vld [vmem:[%s138 + $0x8] sm:$0xff]
      %v152 = vld [vmem:[%s138 + $0x10] sm:$0xff]
      %v153 = vld [vmem:[%s138 + $0x18] sm:$0xff]
      %v154 = vmul.f32 %v150, %v150
      %v155 = vmul.f32 %v151, %v151
      %v156 = vmul.f32 %v152, %v152
      %v157 = vmul.f32 %v153, %v153
      %v158 = vrot.slane %v154, 4
      %v159 = vadd.f32 %v154, %v158
      %v160 = vrot.slane %v159, 2
      %v161 = vadd.f32 %v159, %v160
      %v162 = vrot.slane %v161, 1
      %v163 = vadd.f32 %v161, %v162
      %v164 = vrot.slane %v155, 4
      %v165 = vadd.f32 %v155, %v164
      %v166 = vrot.slane %v165, 2
      %v167 = vadd.f32 %v165, %v166
      %v168 = vrot.slane %v167, 1
      %v169 = vadd.f32 %v167, %v168
      %v170 = vrot.slane %v156, 4
      %v171 = vadd.f32 %v156, %v170
      %v172 = vrot.slane %v171, 2
      %v173 = vadd.f32 %v171, %v172
      %v174 = vrot.slane %v173, 1
      %v175 = vadd.f32 %v173, %v174
      %vm176 = vcmask 392192
      %v177 = vsel %vm176, %v157, 0.0
      %v178 = vrot.slane %v177, 4
      %v179 = vadd.f32 %v177, %v178
      %v180 = vrot.slane %v179, 2
      %v181 = vadd.f32 %v179, %v180
      %v182 = vrot.slane %v181, 1
      %v183 = vadd.f32 %v181, %v182
      %v184 = vmul.f32 %v163, 0.25
      %v185 = vmul.f32 %v169, 0.25
      %v186 = vmul.f32 %v175, 0.25
      %v187 = vmul.f32 %v183, 0.25
      %v188 = vadd.f32 %v184, 1e-08
      %v189 = vadd.f32 %v185, 1e-08
      %v190 = vadd.f32 %v186, 1e-08
      %v191 = vadd.f32 %v187, 1e-08
      %v192 = vrsqrt.pop %v188
      %v193 = vrsqrt.pop %v189
      %v194 = vrsqrt.pop %v190
      %v195 = vrsqrt.pop %v191
      %v196 = vmul.f32 %v150, %v192
      %v197 = vmul.f32 %v151, %v193
      %v198 = vmul.f32 %v152, %v194
      %v199 = vmul.f32 %v153, %v195
      %204 = vrot.lane.b32.xlu0 %v196, 127
      %v205 = vpop.permute.xlu0 %204
      %206 = vrot.lane.b32.xlu0 %v197, 127
      %v207 = vpop.permute.xlu0 %206
      %208 = vrot.lane.b32.xlu0 %v198, 127
      %v209 = vpop.permute.xlu0 %208
      %210 = vrot.lane.b32.xlu0 %v199, 127
      %v211 = vpop.permute.xlu0 %210
      %vm212 = vcmask 1039360
      %v213 = vsel %vm212, %v205, %v207
      %v214 = vsel %vm212, %v207, %v209
      %v215 = vsel %vm212, %v209, %v211
      %219 = vrot.lane.b32.xlu0 %v196, 126
      %v220 = vpop.permute.xlu0 %219
      %221 = vrot.lane.b32.xlu0 %v197, 126
      %v222 = vpop.permute.xlu0 %221
      %223 = vrot.lane.b32.xlu0 %v198, 126
      %v224 = vpop.permute.xlu0 %223
      %225 = vrot.lane.b32.xlu0 %v199, 126
      %v226 = vpop.permute.xlu0 %225
      %vm227 = vcmask 1031168
      %v228 = vsel %vm227, %v220, %v222
      %v229 = vsel %vm227, %v222, %v224
      %v230 = vsel %vm227, %v224, %v226
      %234 = vrot.lane.b32.xlu0 %v196, 110
      %v235 = vpop.permute.xlu0 %234
      %236 = vrot.lane.b32.xlu0 %v197, 110
      %v237 = vpop.permute.xlu0 %236
      %238 = vrot.lane.b32.xlu0 %v198, 110
      %v239 = vpop.permute.xlu0 %238
      %240 = vrot.lane.b32.xlu0 %v199, 110
      %v241 = vpop.permute.xlu0 %240
      %vm242 = vcmask 900096
      %v243 = vsel %vm242, %v235, %v237
      %v244 = vsel %vm242, %v237, %v239
      %v245 = vsel %vm242, %v239, %v241
      %249 = vrot.lane.b32.xlu0 %v196, 109
      %v250 = vpop.permute.xlu0 %249
      %251 = vrot.lane.b32.xlu0 %v197, 109
      %v252 = vpop.permute.xlu0 %251
      %253 = vrot.lane.b32.xlu0 %v198, 109
      %v254 = vpop.permute.xlu0 %253
      %255 = vrot.lane.b32.xlu0 %v199, 109
      %v256 = vpop.permute.xlu0 %255
      %vm257 = vcmask 891904
      %v258 = vsel %vm257, %v250, %v252
      %v259 = vsel %vm257, %v252, %v254
      %v260 = vsel %vm257, %v254, %v256
      %264 = vrot.lane.b32.xlu0 %v196, 108
      %v265 = vpop.permute.xlu0 %264
      %266 = vrot.lane.b32.xlu0 %v197, 108
      %v267 = vpop.permute.xlu0 %266
      %268 = vrot.lane.b32.xlu0 %v198, 108
      %v269 = vpop.permute.xlu0 %268
      %270 = vrot.lane.b32.xlu0 %v199, 108
      %v271 = vpop.permute.xlu0 %270
      %vm272 = vcmask 883712
      %v273 = vsel %vm272, %v265, %v267
      %v274 = vsel %vm272, %v267, %v269
      %v275 = vsel %vm272, %v269, %v271
      %279 = vrot.lane.b32.xlu0 %v196, 92
      %v280 = vpop.permute.xlu0 %279
      %281 = vrot.lane.b32.xlu0 %v197, 92
      %v282 = vpop.permute.xlu0 %281
      %283 = vrot.lane.b32.xlu0 %v198, 92
      %v284 = vpop.permute.xlu0 %283
      %285 = vrot.lane.b32.xlu0 %v199, 92
      %v286 = vpop.permute.xlu0 %285
      %vm287 = vcmask 752640
      %v288 = vsel %vm287, %v280, %v282
      %v289 = vsel %vm287, %v282, %v284
      %v290 = vsel %vm287, %v284, %v286
      %294 = vrot.lane.b32.xlu0 %v196, 91
      %v295 = vpop.permute.xlu0 %294
      %296 = vrot.lane.b32.xlu0 %v197, 91
      %v297 = vpop.permute.xlu0 %296
      %298 = vrot.lane.b32.xlu0 %v198, 91
      %v299 = vpop.permute.xlu0 %298
      %300 = vrot.lane.b32.xlu0 %v199, 91
      %v301 = vpop.permute.xlu0 %300
      %vm302 = vcmask 744448
      %v303 = vsel %vm302, %v295, %v297
      %v304 = vsel %vm302, %v297, %v299
      %v305 = vsel %vm302, %v299, %v301
      %309 = vrot.lane.b32.xlu0 %v196, 90
      %v310 = vpop.permute.xlu0 %309
      %311 = vrot.lane.b32.xlu0 %v197, 90
      %v312 = vpop.permute.xlu0 %311
      %313 = vrot.lane.b32.xlu0 %v198, 90
      %v314 = vpop.permute.xlu0 %313
      %315 = vrot.lane.b32.xlu0 %v199, 90
      %v316 = vpop.permute.xlu0 %315
      %vm317 = vcmask 736256
      %v318 = vsel %vm317, %v310, %v312
      %v319 = vsel %vm317, %v312, %v314
      %v320 = vsel %vm317, %v314, %v316
      %vm324 = vcmask 654336
      %v326 = vsel %vm324, %v144, 0
      %328 = vmatprep.subr.mxu0 %v197
      %329 = vmatpush1.msra.mxu0 %v196
      %330 = vmatprep.subr.mxu0 %v214
      %331 = vmatpush1.msra.mxu0 %v213
      %332 = vmatprep.subr.mxu0 %v229
      %333 = vmatpush1.msra.mxu0 %v228
      %334 = vmatprep.subr.mxu0 %v244
      %335 = vmatpush1.msra.mxu0 %v243
      %336 = vmatprep.subr.mxu0 %v259
      %337 = vmatpush1.msra.mxu0 %v258
      %338 = vmatprep.subr.mxu0 %v274
      %339 = vmatpush1.msra.mxu0 %v273
      %340 = vmatprep.subr.mxu0 %v289
      %341 = vmatpush1.msra.mxu0 %v288
      %342 = vmatprep.subr.mxu0 %v304
      %343 = vmatpush1.msra.mxu0 %v303
      %344 = vmatprep.subr.mxu0 %v319
      %345 = vmatpush1.msra.mxu0 %v318
      %346 = vmatprep.subr.mxu0 %v149
      %347 = vmatpush1.msra.mxu0 %v149
      %348 = vmatprep.subr.mxu0 0.0
      %349 = vmatpush1.msra.mxu0 0.0
      %350 = vmatprep.subr.mxu0 0.0
      %351 = vmatpush1.msra.mxu0 0.0
      %352 = vmatprep.subr.mxu0 0.0
      %353 = vmatpush1.msra.mxu0 0.0
      %354 = vmatprep.subr.mxu0 0.0
      %355 = vmatpush1.msra.mxu0 0.0
      %356 = vmatprep.subr.mxu0 0.0
      %357 = vmatpush1.msra.mxu0 0.0
      %358 = vmatprep.subr.mxu0 0.0
      %359 = vmatpush1.msra.mxu0 0.0
      %360 = vmatprep.subr.mxu0 0.0
      %361 = vmatpush1.msra.mxu0 0.0
      %362 = vmatprep.subr.mxu0 0.0
      %363 = vmatpush1.msra.mxu0 0.0
      %364 = vmatprep.subr.mxu0 0.0
      %365 = vmatpush1.msra.mxu0 0.0
      %366 = vmatprep.subr.mxu0 0.0
      %367 = vmatpush1.msra.mxu0 0.0
      %368 = vmatprep.subr.mxu0 0.0
      %369 = vmatpush1.msra.mxu0 0.0
      %370 = vmatprep.subr.mxu0 0.0
      %371 = vmatpush1.msra.mxu0 0.0
      %372 = vmatprep.subr.mxu0 0.0
      %373 = vmatpush1.msra.mxu0 0.0
      %374 = vmatprep.subr.mxu0 0.0
      %375 = vmatpush1.msra.mxu0 0.0
      %376 = vmatprep.subr.mxu0 0.0
      %377 = vmatpush1.msra.mxu0 0.0
      %378 = vmatprep.subr.mxu0 0.0
      %379 = vmatpush1.msra.mxu0 0.0
      %380 = vmatprep.subr.mxu0 0.0
      %381 = vmatpush1.msra.mxu0 0.0
      %382 = vmatprep.subr.mxu0 0.0
      %383 = vmatpush1.msra.mxu0 0.0
      %384 = vmatprep.subr.mxu0 0.0
      %385 = vmatpush1.msra.mxu0 0.0
      %386 = vmatprep.subr.mxu0 0.0
      %387 = vmatpush1.msra.mxu0 0.0
      %388 = vmatprep.subr.mxu0 0.0
      %389 = vmatpush1.msra.mxu0 0.0
      %390 = vmatprep.subr.mxu0 0.0
      %391 = vmatpush1.msra.mxu0 0.0
      %392 = vmatprep.mubr.f32.mxu0 0.0
      %393 = vmatmul.mubr.f32.gmra.mrb[0].mxu0 %v326
      %v394 = vpop.f32.mrb[0].mxu0
      %v395 = vadd.f32 0.0, %v394
      %v396 = vpop.f32.mrb[0].mxu0
      %v397 = vadd.f32 0.0, %v396
      %398 = vdwg.mxu0
      %399 = vmatprep.subr.mxu0 0.0
      %400 = vmatpush1.msra.mxu0 %v198
      %401 = vmatprep.subr.mxu0 0.0
      %402 = vmatpush1.msra.mxu0 %v215
      %403 = vmatprep.subr.mxu0 0.0
      %404 = vmatpush1.msra.mxu0 %v230
      %405 = vmatprep.subr.mxu0 0.0
      %406 = vmatpush1.msra.mxu0 %v245
      %407 = vmatprep.subr.mxu0 0.0
      %408 = vmatpush1.msra.mxu0 %v260
      %409 = vmatprep.subr.mxu0 0.0
      %410 = vmatpush1.msra.mxu0 %v275
      %411 = vmatprep.subr.mxu0 0.0
      %412 = vmatpush1.msra.mxu0 %v290
      %413 = vmatprep.subr.mxu0 0.0
      %414 = vmatpush1.msra.mxu0 %v305
      %415 = vmatprep.subr.mxu0 0.0
      %416 = vmatpush1.msra.mxu0 %v320
      %417 = vmatprep.subr.mxu0 0.0
      %418 = vmatpush1.msra.mxu0 %v149
      %419 = vmatprep.subr.mxu0 0.0
      %420 = vmatpush1.msra.mxu0 0.0
      %421 = vmatprep.subr.mxu0 0.0
      %422 = vmatpush1.msra.mxu0 0.0
      %423 = vmatprep.subr.mxu0 0.0
      %424 = vmatpush1.msra.mxu0 0.0
      %425 = vmatprep.subr.mxu0 0.0
      %426 = vmatpush1.msra.mxu0 0.0
      %427 = vmatprep.subr.mxu0 0.0
      %428 = vmatpush1.msra.mxu0 0.0
      %429 = vmatprep.subr.mxu0 0.0
      %430 = vmatpush1.msra.mxu0 0.0
      %431 = vmatprep.subr.mxu0 0.0
      %432 = vmatpush1.msra.mxu0 0.0
      %433 = vmatprep.subr.mxu0 0.0
      %434 = vmatpush1.msra.mxu0 0.0
      %435 = vmatprep.subr.mxu0 0.0
      %436 = vmatpush1.msra.mxu0 0.0
      %437 = vmatprep.subr.mxu0 0.0
      %438 = vmatpush1.msra.mxu0 0.0
      %439 = vmatprep.subr.mxu0 0.0
      %440 = vmatpush1.msra.mxu0 0.0
      %441 = vmatprep.subr.mxu0 0.0
      %442 = vmatpush1.msra.mxu0 0.0
      %443 = vmatprep.subr.mxu0 0.0
      %444 = vmatpush1.msra.mxu0 0.0
      %445 = vmatprep.subr.mxu0 0.0
      %446 = vmatpush1.msra.mxu0 0.0
      %447 = vmatprep.subr.mxu0 0.0
      %448 = vmatpush1.msra.mxu0 0.0
      %449 = vmatprep.subr.mxu0 0.0
      %450 = vmatpush1.msra.mxu0 0.0
      %451 = vmatprep.subr.mxu0 0.0
      %452 = vmatpush1.msra.mxu0 0.0
      %453 = vmatprep.subr.mxu0 0.0
      %454 = vmatpush1.msra.mxu0 0.0
      %455 = vmatprep.subr.mxu0 0.0
      %456 = vmatpush1.msra.mxu0 0.0
      %457 = vmatprep.subr.mxu0 0.0
      %458 = vmatpush1.msra.mxu0 0.0
      %459 = vmatprep.subr.mxu0 0.0
      %460 = vmatpush1.msra.mxu0 0.0
      %461 = vmatprep.subr.mxu0 0.0
      %462 = vmatpush1.msra.mxu0 0.0
      %463 = vmatprep.mubr.f32.mxu0 0.0
      %464 = vmatmul.mubr.f32.gmra.mrb[0].mxu0 %v326
      %v465 = vpop.f32.mrb[0].mxu0
      %v466 = vadd.f32 0.0, %v465
      %v467 = vpop.f32.mrb[0].mxu0
      %468 = vdwg.mxu0
      %vm469 = vcmp.ge.f32.partialorder %v395, 0.0
      %vm470 = vcmp.ge.f32.partialorder %v397, 0.0
      %vm471 = vcmp.ge.f32.partialorder %v466, 0.0
      %v472 = vmul.f32 %v395, 0.2
      %v473 = vmul.f32 %v397, 0.2
      %v474 = vmul.f32 %v466, 0.2
      %v475 = vsel %vm469, %v395, %v472
      %v476 = vsel %vm470, %v397, %v473
      %v477 = vsel %vm471, %v466, %v474
      %478 = vst [vmem:[%s143] sm:$0xff] %v475
      %479 = vst [vmem:[%s143 + $0x8] sm:$0xff] %v476
      %480 = vst [vmem:[%s143 + $0x10] sm:$0xff] %v477
      %p481 = scmp.lt.s32.totalorder %s13, 1
      %s482 = scalar_select %p481, %s13, 1
      %s483 = smul.addr %s482, 3
      %s484 = smul.addr %s483, 8
      %s485 = scalar_lea.vmem %s2, %s484
      // Predicated region
      $region29: #{_norm_conv_block.1} parent=27 // pred_check
        %p486 = pneg %p78
      $region30: #{_norm_conv_block.1} parent=27 // pred_check_branch
        %488 = sbr.rel (%p486) target = $region32
      $region31: #{_norm_conv_block.1} parent=27 // pred_region
        _
      $region32: #{_norm_conv_block.1} parent=27 // pred_fallthru
        _
    $region28: #{_norm_conv_block.1} parent=5 // pred_fallthru
      _
    %p489 = scmp.le.s32.totalorder 2, %s8
    // Predicated region
    $region33: #{_norm_conv_block.1} parent=5 // pred_check
      %p490 = pneg %p489
    $region34: #{_norm_conv_block.1} parent=5 // pred_check_branch
      %492 = sbr.rel (%p490) target = $region36
    $region35: #{_norm_conv_block.1} parent=5 // pred_region
      %s493 = ssub.s32 %s8, 2
      // Predicated region
      $region37: #{_norm_conv_block.1} parent=35 // pred_check
        %p494 = pneg %p84
      $region38: #{_norm_conv_block.1} parent=35 // pred_check_branch
        %496 = sbr.rel (%p494) target = $region40
      $region39: #{_norm_conv_block.1} parent=35 // pred_region
        %p497 = scmp.lt.s32.totalorder %s14, 1
        %s498 = scalar_select %p497, %s14, 1
        %s499 = smul.addr %s498, 3
        %s500 = smul.addr %s499, 8
        %s501 = scalar_lea.vmem %s2, %s500
      $region40: #{_norm_conv_block.1} parent=35 // pred_fallthru
        _
    $region36: #{_norm_conv_block.1} parent=5 // pred_fallthru
      _
  $region6: #{_norm_conv_block.1} parent=0 // loop_footer
    %s12 = sadd.s32 1, %s8
  $region7: #{_norm_conv_block.1} parent=0 // loop_footer_branch
    %7 = sbr.rel target = $region3
  $region8: #{_norm_conv_block.1} parent=0 // loop_exit
    _

</llo_original>
